<compile_context>
chip_gen: v7x
topology: tpu7x:2x2x1
jax: 0.10.0
libtpu: 0.0.40
codegen_flags: <defaults>
</compile_context>

<pallas_src>
import jax
import jax.numpy as jnp
import numpy as np
from jax.experimental import pallas as pl
from jax.experimental.pallas import tpu as pltpu

_NEG_SLOPE = 0.01  # nn.LeakyReLU() default


# --------------------------------------------------------------------------- #
# Banded weight construction (wrapper-side, trace-time, tiny).
# --------------------------------------------------------------------------- #
def _conv3x3_banded(w_oihw, width):
    """(Cout, Cin, 3, 3) -> (3, W*Cin, W*Cout) block-banded matrices.

    m[di][wi*Cin+ci, wo*Cout+co] = w[co, ci, di, wi-wo+1] for |wi-wo| <= 1, else 0.
    'same' padding along W is implicit (out-of-range taps have no rows).
    """
    cout, cin = w_oihw.shape[0], w_oihw.shape[1]
    mats = []
    for di in range(3):
        acc = jnp.zeros((width, cin, width, cout), jnp.float32)
        for dj in range(3):
            shift = jnp.eye(width, width, k=1 - dj, dtype=jnp.float32)
            tap = w_oihw[:, :, di, dj].T.astype(jnp.float32)        # (Cin, Cout)
            acc = acc + jnp.einsum('ab,ij->aibj', shift, tap)
        mats.append(acc.reshape(width * cin, width * cout))
    return jnp.stack(mats)


def _conv1x1_banded(w_oihw, width):
    """(Cout, Cin, 1, 1) -> (W*Cin, W*Cout) block-diagonal matrix."""
    eye = jnp.eye(width, dtype=jnp.float32)
    tap = w_oihw[:, :, 0, 0].T.astype(jnp.float32)                  # (Cin, Cout)
    return jnp.einsum('ab,ij->aibj', eye, tap).reshape(
        width * w_oihw.shape[1], width * w_oihw.shape[0])


# --------------------------------------------------------------------------- #
# Kernel: `batch_tile` batch elements (row-stacked padded slabs) per grid step.
# --------------------------------------------------------------------------- #
def convblock_kernel(x_ref, m1f_ref, b1_ref, m2_ref, b2_ref, bs_ref, mask_ref, o_ref):
    r = x_ref.shape[0] - 2          # rows in padded per-element coords (TB * (H+2))
    m_out = r - 2                   # output rows per step (valid + inter-element junk)
    wco = o_ref.shape[-1]           # W * Cout

    # ---- fused conv1 (3x3, Cin->Cin) + 1x1 skip: three banded matmuls --------------
    # Columns [0, WCo) carry the skip (attached to band 2), columns [WCo, WCo+WC) conv1.
    acc = jnp.dot(x_ref[pl.ds(0, r), :], m1f_ref[0],
                  preferred_element_type=jnp.float32)
    acc = acc + jnp.dot(x_ref[pl.ds(1, r), :], m1f_ref[1],
                        preferred_element_type=jnp.float32)
    acc = acc + jnp.dot(x_ref[pl.ds(2, r), :], m1f_ref[2],
                        preferred_element_type=jnp.float32)

    sk = acc[0:m_out, 0:wco] + bs_ref[...]          # 1x1 skip (no activation)

    a1 = acc[:, wco:] + b1_ref[...]                 # conv1 pre-activation, padded coords
    # LeakyReLU (mul+max), then zero the per-element H-padding rows so they act as
    # 'same' padding for conv2 (replaces the VMEM scratch roundtrip).
    y1 = mask_ref[...] * jnp.maximum(a1, _NEG_SLOPE * a1)
    y1 = y1.astype(m2_ref.dtype)

    # ---- conv2 (3x3, Cin->Cout): three banded matmuls on row-shifted y1 -------------
    acc2 = jnp.dot(y1[0:m_out], m2_ref[0], preferred_element_type=jnp.float32)
    acc2 = acc2 + jnp.dot(y1[1:m_out + 1], m2_ref[1], preferred_element_type=jnp.float32)
    acc2 = acc2 + jnp.dot(y1[2:m_out + 2], m2_ref[2], preferred_element_type=jnp.float32)

    t2 = acc2 + b2_ref[...]
    y2 = jnp.maximum(t2, _NEG_SLOPE * t2)           # out_activ_fn applies to layers() only

    # Lane-dense (m_out, W*Cout) store; residual add of the (un-activated) skip.
    o_ref[...] = (y2 + sk).astype(o_ref.dtype)


# --------------------------------------------------------------------------- #
# Wrapper
# --------------------------------------------------------------------------- #
def conv_block(x_nchw, params, *, matmul_dtype=jnp.bfloat16,
               out_dtype=jnp.float32, batch_tile=None):
    """ConvBlock forward.  x_nchw: (B, Cin, H, W) -> (B, Cout, H, W).

    params = (w1, b1, w2, b2, ws, bs) in PyTorch Conv2d layouts:
      w1 (Cin, Cin, 3, 3), b1 (Cin,), w2 (Cout, Cin, 3, 3), b2 (Cout,),
      ws (Cout, Cin, 1, 1), bs (Cout,).
    """
    w1, b1, w2, b2, ws, bs = params
    B, Cin, H, W = x_nchw.shape
    Cout = w2.shape[0]
    WC, WCo, Hp = W * Cin, W * Cout, H + 2

    # Batch tiling: stack TB padded per-element slabs along rows to raise matmul M.
    # (On v7x, pick batch_tile so the grid stays a multiple of 2 for megacore.)
    if batch_tile is None:
        batch_tile = max(1, min(B, 256 // Hp))
    tb = max(1, min(int(batch_tile), B))
    while B % tb:
        tb -= 1
    G = B // tb
    R = tb * Hp                     # rows per step, padded per-element coordinates
    M1 = R - 2                      # output rows per step

    # NCHW -> lane-dense (G, R+2, W*Cin) slabs in matmul dtype (bf16 by default).
    # Per element: [zero row, H data rows, zero row]; one extra zero row at the top and
    # bottom of each stacked slab lets conv1 run directly in padded row coordinates.
    x = jnp.transpose(x_nchw, (0, 2, 3, 1)).astype(matmul_dtype).reshape(B, H, WC)
    x = jnp.pad(x, ((0, 0), (1, 1), (0, 0)))
    x_slab = jnp.pad(x.reshape(G, R, WC), ((0, 0), (1, 1), (0, 0)))   # (G, R+2, WC)

    m1 = _conv3x3_banded(w1, W)                           # (3, WC, WC)   f32
    m2 = _conv3x3_banded(w2, W).astype(matmul_dtype)      # (3, WC, WCo)
    msk = _conv1x1_banded(ws, W)                          # (WC, WCo)     f32
    # Fuse the 1x1 skip onto conv1's band di=2 (its LHS rows coincide with the final
    # output rows); bands 0/1 get zero skip columns.  Skip columns go FIRST so the
    # in-kernel column split lands on a 128-lane boundary whenever W*Cout % 128 == 0.
    zsk = jnp.zeros_like(msk)
    m1f = jnp.concatenate([jnp.stack([zsk, zsk, msk]), m1],
                          axis=2).astype(matmul_dtype)    # (3, WC, WCo + WC)

    b1s = jnp.tile(b1.astype(jnp.float32), W).reshape(1, WC)
    b2s = jnp.tile(b2.astype(jnp.float32), W).reshape(1, WCo)
    bss = jnp.tile(bs.astype(jnp.float32), W).reshape(1, WCo)

    # (R, 1) mask zeroing the per-element H-padding rows of the conv1 output.
    s_idx = np.arange(R) % Hp
    row_mask = jnp.asarray(((s_idx >= 1) & (s_idx <= H)).astype(np.float32)).reshape(R, 1)

    wbytes = np.dtype(matmul_dtype).itemsize
    obytes = np.dtype(out_dtype).itemsize
    weight_bytes = int((m1f.size + m2.size) * wbytes)
    act_bytes = int(((R + 2) * WC * wbytes + M1 * WCo * obytes) * 2)  # double-buffered
    vmem_limit = int(min(112 * 2 ** 20,
                         max(32 * 2 ** 20, 2 * weight_bytes + 2 * act_bytes + (4 << 20))))

    cost = pl.CostEstimate(
        flops=2 * B * H * W * (9 * Cin * Cin + 9 * Cin * Cout + Cin * Cout),
        transcendentals=0,
        bytes_accessed=int(x_slab.size * wbytes + G * M1 * WCo * obytes
                           + weight_bytes
                           + (b1s.size + b2s.size + bss.size + row_mask.size) * 4))

    grid_spec = pltpu.PrefetchScalarGridSpec(
        num_scalar_prefetch=0,
        grid=(G,),
        in_specs=[
            # revolving per-step activation slab: pipelined (double-buffered DMA)
            pl.BlockSpec((None, R + 2, WC), lambda g: (g, 0, 0)),
            # weights / biases / mask: constant index_map -> stay VMEM-resident
            pl.BlockSpec((3, WC, WCo + WC), lambda g: (0, 0, 0)),
            pl.BlockSpec((1, WC), lambda g: (0, 0)),
            pl.BlockSpec((3, WC, WCo), lambda g: (0, 0, 0)),
            pl.BlockSpec((1, WCo), lambda g: (0, 0)),
            pl.BlockSpec((1, WCo), lambda g: (0, 0)),
            pl.BlockSpec((R, 1), lambda g: (0, 0)),
        ],
        out_specs=pl.BlockSpec((None, M1, WCo), lambda g: (g, 0, 0)),
    )

    out_slab = pl.pallas_call(
        convblock_kernel,
        out_shape=jax.ShapeDtypeStruct((G, M1, WCo), out_dtype),
        grid_spec=grid_spec,
        compiler_params=pltpu.CompilerParams(
            dimension_semantics=("parallel",),
            vmem_limit_bytes=vmem_limit),
        cost_estimate=cost,
    )(x_slab, m1f, b1s, m2, b2s, bss, row_mask)

    # Extract valid rows (drop the 2 inter-element junk rows per stacked element) and
    # restore NCHW -- cheap wrapper JAX.
    out = jnp.pad(out_slab, ((0, 0), (0, 2), (0, 0)))      # (G, tb*Hp, WCo)
    out = out.reshape(G, tb, Hp, WCo)[:, :, :H, :]
    out = out.reshape(B, H, W, Cout)
    return jnp.transpose(out, (0, 3, 1, 2))


# --------------------------------------------------------------------------- #
# Pure-JAX reference (lax.conv) for verification.
# --------------------------------------------------------------------------- #
def conv_block_reference(x_nchw, params):
    w1, b1, w2, b2, ws, bs = params
    x = jnp.transpose(x_nchw, (0, 2, 3, 1)).astype(jnp.float32)

    def conv(v, w_oihw, b):
        y = jax.lax.conv_general_dilated(
            v, jnp.transpose(w_oihw, (2, 3, 1, 0)).astype(jnp.float32),
            window_strides=(1, 1), padding='SAME',
            dimension_numbers=('NHWC', 'HWIO', 'NHWC'))
        return y + b.reshape(1, 1, 1, -1)

    def leaky(y):
        return jnp.where(y >= 0, y, _NEG_SLOPE * y)

    y = leaky(conv(x, w1, b1))
    y = leaky(conv(y, w2, b2))
    s = conv(x, ws, bs)
    return jnp.transpose(y + s, (0, 3, 1, 2))


if __name__ == "__main__":
    B, Cin, Cout, H, W = 2, 4, 8, 16, 16
    key = jax.random.PRNGKey(0)
    ks = jax.random.split(key, 7)
    # PyTorch nn.Conv2d parameter layouts (OIHW weights, (C,) biases).
    w1 = 0.1 * jax.random.normal(ks[0], (Cin, Cin, 3, 3), jnp.float32)
    b1 = 0.1 * jax.random.normal(ks[1], (Cin,), jnp.float32)
    w2 = 0.1 * jax.random.normal(ks[2], (Cout, Cin, 3, 3), jnp.float32)
    b2 = 0.1 * jax.random.normal(ks[3], (Cout,), jnp.float32)
    ws = 0.1 * jax.random.normal(ks[4], (Cout, Cin, 1, 1), jnp.float32)
    bs = 0.1 * jax.random.normal(ks[5], (Cout,), jnp.float32)
    x = jax.random.normal(ks[6], (B, Cin, H, W), jnp.float32)
    params = (w1, b1, w2, b2, ws, bs)

    ref = jax.block_until_ready(conv_block_reference(x, params))

    # f32 MXU operands: tight check against the f32 lax.conv reference.
    out_f32 = jax.block_until_ready(
        conv_block(x, params, matmul_dtype=jnp.float32))
    assert out_f32.shape == (B, Cout, H, W)
    np.testing.assert_allclose(np.asarray(out_f32), np.asarray(ref),
                               atol=2e-4, rtol=2e-4)

    # Default path: bf16 MXU operands end-to-end (f32 accumulation / f32 epilogue).
    out_bf16 = jax.block_until_ready(conv_block(x, params))
    np.testing.assert_allclose(np.asarray(out_bf16), np.asarray(ref),
                               atol=5e-2, rtol=5e-2)

    # Per-element tiling path (grid = B, keeps the grid even for v7x megacore).
    out_tb1 = jax.block_until_ready(
        conv_block(x, params, matmul_dtype=jnp.float32, batch_tile=1))
    np.testing.assert_allclose(np.asarray(out_tb1), np.asarray(ref),
                               atol=2e-4, rtol=2e-4)

    print("KERNEL_OK")
</pallas_src>

<mosaic_0001>
module attributes {stable_mosaic.version = 11 : i64} {
  func.func @convblock_kernel(%arg0: i32, %arg1: memref<1x38x64xf32, #tpu.memory_space<vmem>>, %arg2: memref<3x64x192xf32, #tpu.memory_space<vmem>>, %arg3: memref<1x64xf32, #tpu.memory_space<vmem>>, %arg4: memref<3x64x128xf32, #tpu.memory_space<vmem>>, %arg5: memref<1x128xf32, #tpu.memory_space<vmem>>, %arg6: memref<1x128xf32, #tpu.memory_space<vmem>>, %arg7: memref<36x1xf32, #tpu.memory_space<vmem>>, %arg8: memref<1x34x128xf32, #tpu.memory_space<vmem>>) attributes {dimension_semantics = [#tpu.dimension_semantics<parallel>], iteration_bounds = array<i64: 1>, scalar_prefetch = 0 : i64, scratch_operands = 0 : i64, tpu.core_type = #tpu.core_type<tc>, window_params = [{transform_indices = @transform_0, window_bounds = array<i64: 1, 38, 64>}, {pipeline_mode = #tpu.pipeline_mode<synchronous>, transform_indices = @transform_1, window_bounds = array<i64: 3, 64, 192>}, {pipeline_mode = #tpu.pipeline_mode<synchronous>, transform_indices = @transform_2, window_bounds = array<i64: 1, 64>}, {pipeline_mode = #tpu.pipeline_mode<synchronous>, transform_indices = @transform_3, window_bounds = array<i64: 3, 64, 128>}, {pipeline_mode = #tpu.pipeline_mode<synchronous>, transform_indices = @transform_4, window_bounds = array<i64: 1, 128>}, {pipeline_mode = #tpu.pipeline_mode<synchronous>, transform_indices = @transform_5, window_bounds = array<i64: 1, 128>}, {pipeline_mode = #tpu.pipeline_mode<synchronous>, transform_indices = @transform_6, window_bounds = array<i64: 36, 1>}, {transform_indices = @transform_7, window_bounds = array<i64: 1, 34, 128>}]} {
    %c0 = arith.constant 0 : index
    %c0_0 = arith.constant 0 : index
    %c0_1 = arith.constant 0 : index
    %0 = vector.load %arg1[%c0, %c0_0, %c0_1] : memref<1x38x64xf32, #tpu.memory_space<vmem>>, vector<1x36x64xf32>
    %1 = vector.shape_cast %0 : vector<1x36x64xf32> to vector<36x64xf32>
    %c0_2 = arith.constant 0 : index
    %c0_3 = arith.constant 0 : index
    %c0_4 = arith.constant 0 : index
    %2 = vector.load %arg2[%c0_2, %c0_3, %c0_4] : memref<3x64x192xf32, #tpu.memory_space<vmem>>, vector<1x64x192xf32>
    %3 = vector.shape_cast %2 : vector<1x64x192xf32> to vector<64x192xf32>
    %cst = arith.constant dense<0.000000e+00> : vector<36x192xf32>
    %4 = tpu.matmul %1, %3, %cst {dimension_numbers = #tpu.dot_dimension_numbers<[1], [0], [0], [1], [0, 0, 1, 1], [], []>} : vector<36x64xf32>, vector<64x192xf32>, vector<36x192xf32> -> vector<36x192xf32>
    %c0_5 = arith.constant 0 : index
    %c1 = arith.constant 1 : index
    %c0_6 = arith.constant 0 : index
    %5 = vector.load %arg1[%c0_5, %c1, %c0_6] : memref<1x38x64xf32, #tpu.memory_space<vmem>>, vector<1x36x64xf32>
    %6 = vector.shape_cast %5 : vector<1x36x64xf32> to vector<36x64xf32>
    %c1_7 = arith.constant 1 : index
    %c0_8 = arith.constant 0 : index
    %c0_9 = arith.constant 0 : index
    %7 = vector.load %arg2[%c1_7, %c0_8, %c0_9] : memref<3x64x192xf32, #tpu.memory_space<vmem>>, vector<1x64x192xf32>
    %8 = vector.shape_cast %7 : vector<1x64x192xf32> to vector<64x192xf32>
    %cst_10 = arith.constant dense<0.000000e+00> : vector<36x192xf32>
    %9 = tpu.matmul %6, %8, %cst_10 {dimension_numbers = #tpu.dot_dimension_numbers<[1], [0], [0], [1], [0, 0, 1, 1], [], []>} : vector<36x64xf32>, vector<64x192xf32>, vector<36x192xf32> -> vector<36x192xf32>
    %10 = arith.addf %4, %9 : vector<36x192xf32>
    %c0_11 = arith.constant 0 : index
    %c2 = arith.constant 2 : index
    %c0_12 = arith.constant 0 : index
    %11 = vector.load %arg1[%c0_11, %c2, %c0_12] : memref<1x38x64xf32, #tpu.memory_space<vmem>>, vector<1x36x64xf32>
    %12 = vector.shape_cast %11 : vector<1x36x64xf32> to vector<36x64xf32>
    %c2_13 = arith.constant 2 : index
    %c0_14 = arith.constant 0 : index
    %c0_15 = arith.constant 0 : index
    %13 = vector.load %arg2[%c2_13, %c0_14, %c0_15] : memref<3x64x192xf32, #tpu.memory_space<vmem>>, vector<1x64x192xf32>
    %14 = vector.shape_cast %13 : vector<1x64x192xf32> to vector<64x192xf32>
    %cst_16 = arith.constant dense<0.000000e+00> : vector<36x192xf32>
    %15 = tpu.matmul %12, %14, %cst_16 {dimension_numbers = #tpu.dot_dimension_numbers<[1], [0], [0], [1], [0, 0, 1, 1], [], []>} : vector<36x64xf32>, vector<64x192xf32>, vector<36x192xf32> -> vector<36x192xf32>
    %16 = arith.addf %10, %15 : vector<36x192xf32>
    %17 = vector.extract_strided_slice %16 {offsets = [0, 0], sizes = [34, 128], strides = [1, 1]} : vector<36x192xf32> to vector<34x128xf32>
    %c0_17 = arith.constant 0 : index
    %c0_18 = arith.constant 0 : index
    %18 = vector.load %arg6[%c0_17, %c0_18] : memref<1x128xf32, #tpu.memory_space<vmem>>, vector<1x128xf32>
    %19 = vector.broadcast %18 : vector<1x128xf32> to vector<34x128xf32>
    %20 = arith.addf %17, %19 : vector<34x128xf32>
    %21 = vector.extract_strided_slice %16 {offsets = [0, 128], sizes = [36, 64], strides = [1, 1]} : vector<36x192xf32> to vector<36x64xf32>
    %c0_19 = arith.constant 0 : index
    %c0_20 = arith.constant 0 : index
    %22 = vector.load %arg3[%c0_19, %c0_20] : memref<1x64xf32, #tpu.memory_space<vmem>>, vector<1x64xf32>
    %23 = vector.broadcast %22 : vector<1x64xf32> to vector<36x64xf32>
    %24 = arith.addf %21, %23 : vector<36x64xf32>
    %c0_21 = arith.constant 0 : index
    %c0_22 = arith.constant 0 : index
    %25 = vector.load %arg7[%c0_21, %c0_22] : memref<36x1xf32, #tpu.memory_space<vmem>>, vector<36x1xf32>
    %cst_23 = arith.constant 0.00999999977 : f32
    %26 = vector.broadcast %cst_23 : f32 to vector<36x64xf32>
    %27 = arith.mulf %26, %24 : vector<36x64xf32>
    %28 = arith.maximumf %24, %27 : vector<36x64xf32>
    %29 = vector.broadcast %25 : vector<36x1xf32> to vector<36x64xf32>
    %30 = arith.mulf %29, %28 : vector<36x64xf32>
    %31 = vector.extract_strided_slice %30 {offsets = [0, 0], sizes = [34, 64], strides = [1, 1]} : vector<36x64xf32> to vector<34x64xf32>
    %c0_24 = arith.constant 0 : index
    %c0_25 = arith.constant 0 : index
    %c0_26 = arith.constant 0 : index
    %32 = vector.load %arg4[%c0_24, %c0_25, %c0_26] : memref<3x64x128xf32, #tpu.memory_space<vmem>>, vector<1x64x128xf32>
    %33 = vector.shape_cast %32 : vector<1x64x128xf32> to vector<64x128xf32>
    %cst_27 = arith.constant dense<0.000000e+00> : vector<34x128xf32>
    %34 = tpu.matmul %31, %33, %cst_27 {dimension_numbers = #tpu.dot_dimension_numbers<[1], [0], [0], [1], [0, 0, 1, 1], [], []>} : vector<34x64xf32>, vector<64x128xf32>, vector<34x128xf32> -> vector<34x128xf32>
    %35 = vector.extract_strided_slice %30 {offsets = [1, 0], sizes = [34, 64], strides = [1, 1]} : vector<36x64xf32> to vector<34x64xf32>
    %c1_28 = arith.constant 1 : index
    %c0_29 = arith.constant 0 : index
    %c0_30 = arith.constant 0 : index
    %36 = vector.load %arg4[%c1_28, %c0_29, %c0_30] : memref<3x64x128xf32, #tpu.memory_space<vmem>>, vector<1x64x128xf32>
    %37 = vector.shape_cast %36 : vector<1x64x128xf32> to vector<64x128xf32>
    %cst_31 = arith.constant dense<0.000000e+00> : vector<34x128xf32>
    %38 = tpu.matmul %35, %37, %cst_31 {dimension_numbers = #tpu.dot_dimension_numbers<[1], [0], [0], [1], [0, 0, 1, 1], [], []>} : vector<34x64xf32>, vector<64x128xf32>, vector<34x128xf32> -> vector<34x128xf32>
    %39 = arith.addf %34, %38 : vector<34x128xf32>
    %40 = vector.extract_strided_slice %30 {offsets = [2, 0], sizes = [34, 64], strides = [1, 1]} : vector<36x64xf32> to vector<34x64xf32>
    %c2_32 = arith.constant 2 : index
    %c0_33 = arith.constant 0 : index
    %c0_34 = arith.constant 0 : index
    %41 = vector.load %arg4[%c2_32, %c0_33, %c0_34] : memref<3x64x128xf32, #tpu.memory_space<vmem>>, vector<1x64x128xf32>
    %42 = vector.shape_cast %41 : vector<1x64x128xf32> to vector<64x128xf32>
    %cst_35 = arith.constant dense<0.000000e+00> : vector<34x128xf32>
    %43 = tpu.matmul %40, %42, %cst_35 {dimension_numbers = #tpu.dot_dimension_numbers<[1], [0], [0], [1], [0, 0, 1, 1], [], []>} : vector<34x64xf32>, vector<64x128xf32>, vector<34x128xf32> -> vector<34x128xf32>
    %44 = arith.addf %39, %43 : vector<34x128xf32>
    %c0_36 = arith.constant 0 : index
    %c0_37 = arith.constant 0 : index
    %45 = vector.load %arg5[%c0_36, %c0_37] : memref<1x128xf32, #tpu.memory_space<vmem>>, vector<1x128xf32>
    %46 = vector.broadcast %45 : vector<1x128xf32> to vector<34x128xf32>
    %47 = arith.addf %44, %46 : vector<34x128xf32>
    %cst_38 = arith.constant 0.00999999977 : f32
    %48 = vector.broadcast %cst_38 : f32 to vector<34x128xf32>
    %49 = arith.mulf %48, %47 : vector<34x128xf32>
    %50 = arith.maximumf %47, %49 : vector<34x128xf32>
    %51 = arith.addf %50, %20 : vector<34x128xf32>
    %c0_39 = arith.constant 0 : index
    %c0_40 = arith.constant 0 : index
    %c0_41 = arith.constant 0 : index
    %52 = vector.load %arg8[%c0_39, %c0_40, %c0_41] : memref<1x34x128xf32, #tpu.memory_space<vmem>>, vector<1x34x128xf32>
    %53 = vector.shape_cast %52 : vector<1x34x128xf32> to vector<34x128xf32>
    %54 = vector.shape_cast %51 : vector<34x128xf32> to vector<1x34x128xf32>
    tpu.vector_store %arg8[%c0_39, %c0_40, %c0_41], %54 {strides = array<i32>} : memref<1x34x128xf32, #tpu.memory_space<vmem>>, vector<1x34x128xf32>,
    return
  }
  func.func @transform_0(%arg0: i32) -> (i32, i32, i32) {
    %c0_i32 = arith.constant 0 : i32
    %c0_i32_0 = arith.constant 0 : i32
    %c0_i32_1 = arith.constant 0 : i32
    return %arg0, %c0_i32, %c0_i32_0 : i32, i32, i32
  }
  func.func @transform_1(%arg0: i32) -> (i32, i32, i32) {
    %c0_i32 = arith.constant 0 : i32
    %c0_i32_0 = arith.constant 0 : i32
    %c0_i32_1 = arith.constant 0 : i32
    %c0_i32_2 = arith.constant 0 : i32
    return %c0_i32, %c0_i32_0, %c0_i32_1 : i32, i32, i32
  }
  func.func @transform_2(%arg0: i32) -> (i32, i32) {
    %c0_i32 = arith.constant 0 : i32
    %c0_i32_0 = arith.constant 0 : i32
    %c0_i32_1 = arith.constant 0 : i32
    return %c0_i32, %c0_i32_0 : i32, i32
  }
  func.func @transform_3(%arg0: i32) -> (i32, i32, i32) {
    %c0_i32 = arith.constant 0 : i32
    %c0_i32_0 = arith.constant 0 : i32
    %c0_i32_1 = arith.constant 0 : i32
    %c0_i32_2 = arith.constant 0 : i32
    return %c0_i32, %c0_i32_0, %c0_i32_1 : i32, i32, i32
  }
  func.func @transform_4(%arg0: i32) -> (i32, i32) {
    %c0_i32 = arith.constant 0 : i32
    %c0_i32_0 = arith.constant 0 : i32
    %c0_i32_1 = arith.constant 0 : i32
    return %c0_i32, %c0_i32_0 : i32, i32
  }
  func.func @transform_5(%arg0: i32) -> (i32, i32) {
    %c0_i32 = arith.constant 0 : i32
    %c0_i32_0 = arith.constant 0 : i32
    %c0_i32_1 = arith.constant 0 : i32
    return %c0_i32, %c0_i32_0 : i32, i32
  }
  func.func @transform_6(%arg0: i32) -> (i32, i32) {
    %c0_i32 = arith.constant 0 : i32
    %c0_i32_0 = arith.constant 0 : i32
    %c0_i32_1 = arith.constant 0 : i32
    return %c0_i32, %c0_i32_0 : i32, i32
  }
  func.func @transform_7(%arg0: i32) -> (i32, i32, i32) {
    %c0_i32 = arith.constant 0 : i32
    %c0_i32_0 = arith.constant 0 : i32
    %c0_i32_1 = arith.constant 0 : i32
    return %arg0, %c0_i32, %c0_i32_0 : i32, i32, i32
  }
}

</mosaic_0001>

<llo_original>
// kernel: tpu_custom_call.1
$region0: #{tpu_custom_call.1}
  #allocation0 [shape = 'u32[]', space=smem, size = 0x4, offset = 0x4, fixed_abs, tag = 'smem constant byte address 0x4 - core index']
  #allocation1 [shape = 'u32[144,128]{1,0:T(1,128)}', space=vmem, size = 0x12000, scoped, tag = 'internal scratch']
  %s0 = inlined_call_operand.vmem [shape: f32[1,38,64], index: 0, kind: input, shape index: {}]
  %s1 = inlined_call_operand.hbm [shape: f32[3,64,192], index: 1, kind: input, shape index: {}]
  %s2 = inlined_call_operand.vmem [shape: f32[1,64], index: 2, kind: input, shape index: {}]
  %s3 = inlined_call_operand.hbm [shape: f32[3,64,128], index: 3, kind: input, shape index: {}]
  %s4 = inlined_call_operand.vmem [shape: f32[1,128], index: 4, kind: input, shape index: {}]
  %s5 = inlined_call_operand.vmem [shape: f32[1,128], index: 5, kind: input, shape index: {}]
  %s6 = inlined_call_operand.vmem [shape: f32[36,1], index: 6, kind: input, shape index: {}]
  %s7 = inlined_call_operand.vmem [shape: f32[1,34,128], index: 7, kind: output, shape index: {}]
  %s8 = sld [smem:[#allocation0]]
  $region46: #{tpu_custom_call.1} parent=0
    _
  %s10 = ssub.s32 1, %s8
  %s11 = scalar_select 0, %s10, %s8
  $region1: #{tpu_custom_call.1} parent=0
    #allocation2 [shape = 'u8[196608]{0}', space=vmem, size = 0x30000, scoped, tag = 'input window, operand 1, single buffered']
    #allocation3 [shape = 's32[1]{0}', space=sflag, size = 0x4, scoped, tag = 'scoped memory for tpu_custom_call.1']
    #allocation4 [shape = 'u8[98304]{0}', space=vmem, size = 0x18000, scoped, tag = 'input window, operand 3, single buffered']
    #allocation5 [shape = 's32[1]{0}', space=sflag, size = 0x4, scoped, tag = 'scoped memory for tpu_custom_call.1']
    %12 = vsyncpa [#allocation3], 0
    %13 = vsyncpa [#allocation5], 0
    // Predicated region
    $region2: #{tpu_custom_call.1} parent=1 // pred_check
      _
    $region3: #{tpu_custom_call.1} parent=1 // pred_check_branch
      %15 = sbr.rel (0) target = $region5
    $region4: #{tpu_custom_call.1} parent=1 // pred_region
      _
    $region5: #{tpu_custom_call.1} parent=1 // pred_fallthru
      _
    // Predicated region
    $region6: #{tpu_custom_call.1} parent=1 // pred_check
      _
    $region7: #{tpu_custom_call.1} parent=1 // pred_check_branch
      %17 = sbr.rel (0) target = $region9
    $region8: #{tpu_custom_call.1} parent=1 // pred_region
      %s19 = ssub.s32 6144, 6144
      %20 = vsyncadd [#allocation3], %s19
      %s21 = sshll.u32 [#allocation2], 4
      %s22 = int_to_ptr.vmem [resolvable:$true] %s21
      %27 = dma.hbm_to_vmem [thread:$0]  %s1, 6144, %s22, [#allocation3], 256, 256, 16
    $region9: #{tpu_custom_call.1} parent=1 // pred_fallthru
      _
    // Predicated region
    $region10: #{tpu_custom_call.1} parent=1 // pred_check
      _
    $region11: #{tpu_custom_call.1} parent=1 // pred_check_branch
      %29 = sbr.rel (0) target = $region13
    $region12: #{tpu_custom_call.1} parent=1 // pred_region
      _
    $region13: #{tpu_custom_call.1} parent=1 // pred_fallthru
      _
    // Predicated region
    $region14: #{tpu_custom_call.1} parent=1 // pred_check
      _
    $region15: #{tpu_custom_call.1} parent=1 // pred_check_branch
      %31 = sbr.rel (0) target = $region17
    $region16: #{tpu_custom_call.1} parent=1 // pred_region
      %s33 = ssub.s32 3072, 3072
      %34 = vsyncadd [#allocation5], %s33
      %s35 = sshll.u32 [#allocation4], 4
      %s36 = int_to_ptr.vmem [resolvable:$true] %s35
      %41 = dma.hbm_to_vmem [thread:$0]  %s3, 3072, %s36, [#allocation5], 128, 128, 8
    $region17: #{tpu_custom_call.1} parent=1 // pred_fallthru
      _
    // Predicated region
    $region18: #{tpu_custom_call.1} parent=1 // pred_check
      _
    $region19: #{tpu_custom_call.1} parent=1 // pred_check_branch
      %43 = sbr.rel (0) target = $region21
    $region20: #{tpu_custom_call.1} parent=1 // pred_region
      _
    $region21: #{tpu_custom_call.1} parent=1 // pred_fallthru
      _
    // Predicated region
    $region22: #{tpu_custom_call.1} parent=1 // pred_check
      _
    $region23: #{tpu_custom_call.1} parent=1 // pred_check_branch
      %45 = sbr.rel (0) target = $region25
    $region24: #{tpu_custom_call.1} parent=1 // pred_region
      _
    $region25: #{tpu_custom_call.1} parent=1 // pred_fallthru
      _
    // Predicated region
    $region26: #{tpu_custom_call.1} parent=1 // pred_check
      _
    $region27: #{tpu_custom_call.1} parent=1 // pred_check_branch
      %47 = sbr.rel (0) target = $region29
    $region28: #{tpu_custom_call.1} parent=1 // pred_region
      _
    $region29: #{tpu_custom_call.1} parent=1 // pred_fallthru
      _
    // Predicated region
    $region30: #{tpu_custom_call.1} parent=1 // pred_check
      _
    $region31: #{tpu_custom_call.1} parent=1 // pred_check_branch
      %49 = sbr.rel (0) target = $region33
    $region32: #{tpu_custom_call.1} parent=1 // pred_region
      %50 = dma.done [#allocation3], 6144
    $region33: #{tpu_custom_call.1} parent=1 // pred_fallthru
      _
    // Predicated region
    $region34: #{tpu_custom_call.1} parent=1 // pred_check
      _
    $region35: #{tpu_custom_call.1} parent=1 // pred_check_branch
      %52 = sbr.rel (0) target = $region37
    $region36: #{tpu_custom_call.1} parent=1 // pred_region
      %53 = dma.done [#allocation5], 3072
    $region37: #{tpu_custom_call.1} parent=1 // pred_fallthru
      _
    %v54 = vld [vmem:[%s0] sm:$0xff]
    %v55 = vld [vmem:[%s0 + $0x8] sm:$0xff]
    %v56 = vld [vmem:[%s0 + $0x10] sm:$0xff]
    %v57 = vld [vmem:[%s0 + $0x18] sm:$0xff]
    %v58 = vld [vmem:[%s0 + $0x20] sm:$0xf]
    %v59 = vld [vmem:[#allocation2] sm:$0xff]
    %v60 = vld [vmem:[#allocation2 + $0x8] sm:$0xff]
    %v61 = vld [vmem:[#allocation2 + $0x10] sm:$0xff]
    %v62 = vld [vmem:[#allocation2 + $0x18] sm:$0xff]
    %v63 = vld [vmem:[#allocation2 + $0x20] sm:$0xff]
    %v64 = vld [vmem:[#allocation2 + $0x28] sm:$0xff]
    %v65 = vld [vmem:[#allocation2 + $0x30] sm:$0xff]
    %v66 = vld [vmem:[#allocation2 + $0x38] sm:$0xff]
    %v67 = vld [vmem:[#allocation2 + $0x40] sm:$0xff]
    %v68 = vld [vmem:[#allocation2 + $0x48] sm:$0xff]
    %v69 = vld [vmem:[#allocation2 + $0x50] sm:$0xff]
    %v70 = vld [vmem:[#allocation2 + $0x58] sm:$0xff]
    %v71 = vld [vmem:[#allocation2 + $0x60] sm:$0xff]
    %v72 = vld [vmem:[#allocation2 + $0x68] sm:$0xff]
    %v73 = vld [vmem:[#allocation2 + $0x70] sm:$0xff]
    %v74 = vld [vmem:[#allocation2 + $0x78] sm:$0xff]
    %v75 = vld [vmem:[%s0 + $0x1] sm:$0xff]
    %v76 = vld [vmem:[%s0 + $0x9] sm:$0xff]
    %v77 = vld [vmem:[%s0 + $0x11] sm:$0xff]
    %v78 = vld [vmem:[%s0 + $0x19] sm:$0xff]
    %v79 = vld [vmem:[%s0 + $0x21] sm:$0xf]
    %s80 = scalar_lea.vmem [#allocation2], 128
    %v81 = vld [vmem:[%s80] sm:$0xff]
    %v82 = vld [vmem:[%s80 + $0x8] sm:$0xff]
    %v83 = vld [vmem:[%s80 + $0x10] sm:$0xff]
    %v84 = vld [vmem:[%s80 + $0x18] sm:$0xff]
    %v85 = vld [vmem:[%s80 + $0x20] sm:$0xff]
    %v86 = vld [vmem:[%s80 + $0x28] sm:$0xff]
    %v87 = vld [vmem:[%s80 + $0x30] sm:$0xff]
    %v88 = vld [vmem:[%s80 + $0x38] sm:$0xff]
    %v89 = vld [vmem:[%s80 + $0x40] sm:$0xff]
    %v90 = vld [vmem:[%s80 + $0x48] sm:$0xff]
    %v91 = vld [vmem:[%s80 + $0x50] sm:$0xff]
    %v92 = vld [vmem:[%s80 + $0x58] sm:$0xff]
    %v93 = vld [vmem:[%s80 + $0x60] sm:$0xff]
    %v94 = vld [vmem:[%s80 + $0x68] sm:$0xff]
    %v95 = vld [vmem:[%s80 + $0x70] sm:$0xff]
    %v96 = vld [vmem:[%s80 + $0x78] sm:$0xff]
    %vm97 = vcmask 523264
    %v99 = vsel %vm97, %v75, 0
    %v102 = vsel %vm97, %v76, 0
    %v105 = vsel %vm97, %v77, 0
    %v108 = vsel %vm97, %v78, 0
    %v111 = vsel %vm97, %v79, 0
    %113 = vmatprep.subr.mxu0 %v82
    %114 = vmatpush1.msra.mxu0 %v81
    %115 = vmatprep.subr.mxu0 %v84
    %116 = vmatpush1.msra.mxu0 %v83
    %117 = vmatprep.subr.mxu0 %v86
    %118 = vmatpush1.msra.mxu0 %v85
    %119 = vmatprep.subr.mxu0 %v88
    %120 = vmatpush1.msra.mxu0 %v87
    %121 = vmatprep.subr.mxu0 %v90
    %122 = vmatpush1.msra.mxu0 %v89
    %123 = vmatprep.subr.mxu0 %v92
    %124 = vmatpush1.msra.mxu0 %v91
    %125 = vmatprep.subr.mxu0 %v94
    %126 = vmatpush1.msra.mxu0 %v93
    %127 = vmatprep.subr.mxu0 %v96
    %128 = vmatpush1.msra.mxu0 %v95
    %129 = vmatprep.subr.mxu0 0.0
    %130 = vmatpush1.msra.mxu0 0.0
    %131 = vmatprep.subr.mxu0 0.0
    %132 = vmatpush1.msra.mxu0 0.0
    %133 = vmatprep.subr.mxu0 0.0
    %134 = vmatpush1.msra.mxu0 0.0
    %135 = vmatprep.subr.mxu0 0.0
    %136 = vmatpush1.msra.mxu0 0.0
    %137 = vmatprep.subr.mxu0 0.0
    %138 = vmatpush1.msra.mxu0 0.0
    %139 = vmatprep.subr.mxu0 0.0
    %140 = vmatpush1.msra.mxu0 0.0
    %141 = vmatprep.subr.mxu0 0.0
    %142 = vmatpush1.msra.mxu0 0.0
    %143 = vmatprep.subr.mxu0 0.0
    %144 = vmatpush1.msra.mxu0 0.0
    %145 = vmatprep.subr.mxu0 0.0
    %146 = vmatpush1.msra.mxu0 0.0
    %147 = vmatprep.subr.mxu0 0.0
    %148 = vmatpush1.msra.mxu0 0.0
    %149 = vmatprep.subr.mxu0 0.0
    %150 = vmatpush1.msra.mxu0 0.0
    %151 = vmatprep.subr.mxu0 0.0
    %152 = vmatpush1.msra.mxu0 0.0
    %153 = vmatprep.subr.mxu0 0.0
    %154 = vmatpush1.msra.mxu0 0.0
    %155 = vmatprep.subr.mxu0 0.0
    %156 = vmatpush1.msra.mxu0 0.0
    %157 = vmatprep.subr.mxu0 0.0
    %158 = vmatpush1.msra.mxu0 0.0
    %159 = vmatprep.subr.mxu0 0.0
    %160 = vmatpush1.msra.mxu0 0.0
    %161 = vmatprep.subr.mxu0 0.0
    %162 = vmatpush1.msra.mxu0 0.0
    %163 = vmatprep.subr.mxu0 0.0
    %164 = vmatpush1.msra.mxu0 0.0
    %165 = vmatprep.subr.mxu0 0.0
    %166 = vmatpush1.msra.mxu0 0.0
    %167 = vmatprep.subr.mxu0 0.0
    %168 = vmatpush1.msra.mxu0 0.0
    %169 = vmatprep.subr.mxu0 0.0
    %170 = vmatpush1.msra.mxu0 0.0
    %171 = vmatprep.subr.mxu0 0.0
    %172 = vmatpush1.msra.mxu0 0.0
    %173 = vmatprep.subr.mxu0 0.0
    %174 = vmatpush1.msra.mxu0 0.0
    %175 = vmatprep.subr.mxu0 0.0
    %176 = vmatpush1.msra.mxu0 0.0
    %177 = vmatprep.mubr.f32.mxu0 0.0
    %178 = vmatmul.mubr.f32.gmra.mrb[0].mxu0 %v99
    %v179 = vpop.f32.mrb[0].mxu0
    %v180 = vadd.f32 0.0, %v179
    %v181 = vpop.f32.mrb[0].mxu0
    %v182 = vadd.f32 0.0, %v181
    %183 = vmatprep.mubr.f32.mxu0 0.0
    %184 = vmatmul.mubr.f32.gmra.mrb[0].mxu0 %v102
    %v185 = vpop.f32.mrb[0].mxu0
    %v186 = vadd.f32 0.0, %v185
    %v187 = vpop.f32.mrb[0].mxu0
    %v188 = vadd.f32 0.0, %v187
    %189 = vmatprep.mubr.f32.mxu0 0.0
    %190 = vmatmul.mubr.f32.gmra.mrb[0].mxu0 %v105
    %v191 = vpop.f32.mrb[0].mxu0
    %v192 = vadd.f32 0.0, %v191
    %v193 = vpop.f32.mrb[0].mxu0
    %v194 = vadd.f32 0.0, %v193
    %195 = vmatprep.mubr.f32.mxu0 0.0
    %196 = vmatmul.mubr.f32.gmra.mrb[0].mxu0 %v108
    %v197 = vpop.f32.mrb[0].mxu0
    %v198 = vadd.f32 0.0, %v197
    %v199 = vpop.f32.mrb[0].mxu0
    %v200 = vadd.f32 0.0, %v199
    %201 = vmatprep.mubr.f32.mxu0 0.0
    %202 = vmatmul.mubr.f32.gmra.mrb[0].mxu0 %v111
    %v203 = vpop.f32.mrb[0].mxu0
    %v204 = vadd.f32 0.0, %v203
    %v205 = vpop.f32.mrb[0].mxu0
    %v206 = vadd.f32 0.0, %v205
    %207 = vdwg.mxu0
    %v209 = vsel %vm97, %v54, 0
    %v212 = vsel %vm97, %v55, 0
    %v215 = vsel %vm97, %v56, 0
    %v218 = vsel %vm97, %v57, 0
    %v221 = vsel %vm97, %v58, 0
    %223 = vmatprep.subr.mxu0 %v60
    %224 = vmatpush1.msra.mxu0 %v59
    %225 = vmatprep.subr.mxu0 %v62
    %226 = vmatpush1.msra.mxu0 %v61
    %227 = vmatprep.subr.mxu0 %v64
    %228 = vmatpush1.msra.mxu0 %v63
    %229 = vmatprep.subr.mxu0 %v66
    %230 = vmatpush1.msra.mxu0 %v65
    %231 = vmatprep.subr.mxu0 %v68
    %232 = vmatpush1.msra.mxu0 %v67
    %233 = vmatprep.subr.mxu0 %v70
    %234 = vmatpush1.msra.mxu0 %v69
    %235 = vmatprep.subr.mxu0 %v72
    %236 = vmatpush1.msra.mxu0 %v71
    %237 = vmatprep.subr.mxu0 %v74
    %238 = vmatpush1.msra.mxu0 %v73
    %239 = vmatprep.subr.mxu0 0.0
    %240 = vmatpush1.msra.mxu0 0.0
    %241 = vmatprep.subr.mxu0 0.0
    %242 = vmatpush1.msra.mxu0 0.0
    %243 = vmatprep.subr.mxu0 0.0
    %244 = vmatpush1.msra.mxu0 0.0
    %245 = vmatprep.subr.mxu0 0.0
    %246 = vmatpush1.msra.mxu0 0.0
    %247 = vmatprep.subr.mxu0 0.0
    %248 = vmatpush1.msra.mxu0 0.0
    %249 = vmatprep.subr.mxu0 0.0
    %250 = vmatpush1.msra.mxu0 0.0
    %251 = vmatprep.subr.mxu0 0.0
    %252 = vmatpush1.msra.mxu0 0.0
    %253 = vmatprep.subr.mxu0 0.0
    %254 = vmatpush1.msra.mxu0 0.0
    %255 = vmatprep.subr.mxu0 0.0
    %256 = vmatpush1.msra.mxu0 0.0
    %257 = vmatprep.subr.mxu0 0.0
    %258 = vmatpush1.msra.mxu0 0.0
    %259 = vmatprep.subr.mxu0 0.0
    %260 = vmatpush1.msra.mxu0 0.0
    %261 = vmatprep.subr.mxu0 0.0
    %262 = vmatpush1.msra.mxu0 0.0
    %263 = vmatprep.subr.mxu0 0.0
    %264 = vmatpush1.msra.mxu0 0.0
    %265 = vmatprep.subr.mxu0 0.0
    %266 = vmatpush1.msra.mxu0 0.0
    %267 = vmatprep.subr.mxu0 0.0
    %268 = vmatpush1.msra.mxu0 0.0
    %269 = vmatprep.subr.mxu0 0.0
    %270 = vmatpush1.msra.mxu0 0.0
    %271 = vmatprep.subr.mxu0 0.0
    %272 = vmatpush1.msra.mxu0 0.0
    %273 = vmatprep.subr.mxu0 0.0
    %274 = vmatpush1.msra.mxu0 0.0
    %275 = vmatprep.subr.mxu0 0.0
    %276 = vmatpush1.msra.mxu0 0.0
    %277 = vmatprep.subr.mxu0 0.0
    %278 = vmatpush1.msra.mxu0 0.0
    %279 = vmatprep.subr.mxu0 0.0
    %280 = vmatpush1.msra.mxu0 0.0
    %281 = vmatprep.subr.mxu0 0.0
    %282 = vmatpush1.msra.mxu0 0.0
    %283 = vmatprep.subr.mxu0 0.0
    %284 = vmatpush1.msra.mxu0 0.0
    %285 = vmatprep.subr.mxu0 0.0
    %286 = vmatpush1.msra.mxu0 0.0
    %287 = vmatprep.mubr.f32.mxu0 0.0
    %288 = vmatmul.mubr.f32.gmra.mrb[0].mxu0 %v209
    %v289 = vpop.f32.mrb[0].mxu0
    %v290 = vadd.f32 %v180, %v289
    %v291 = vpop.f32.mrb[0].mxu0
    %v292 = vadd.f32 %v182, %v291
    %293 = vmatprep.mubr.f32.mxu0 0.0
    %294 = vmatmul.mubr.f32.gmra.mrb[0].mxu0 %v212
    %v295 = vpop.f32.mrb[0].mxu0
    %v296 = vadd.f32 %v186, %v295
    %v297 = vpop.f32.mrb[0].mxu0
    %v298 = vadd.f32 %v188, %v297
    %299 = vmatprep.mubr.f32.mxu0 0.0
    %300 = vmatmul.mubr.f32.gmra.mrb[0].mxu0 %v215
    %v301 = vpop.f32.mrb[0].mxu0
    %v302 = vadd.f32 %v192, %v301
    %v303 = vpop.f32.mrb[0].mxu0
    %v304 = vadd.f32 %v194, %v303
    %305 = vmatprep.mubr.f32.mxu0 0.0
    %306 = vmatmul.mubr.f32.gmra.mrb[0].mxu0 %v218
    %v307 = vpop.f32.mrb[0].mxu0
    %v308 = vadd.f32 %v198, %v307
    %v309 = vpop.f32.mrb[0].mxu0
    %v310 = vadd.f32 %v200, %v309
    %311 = vmatprep.mubr.f32.mxu0 0.0
    %312 = vmatmul.mubr.f32.gmra.mrb[0].mxu0 %v221
    %v313 = vpop.f32.mrb[0].mxu0
    %v314 = vadd.f32 %v204, %v313
    %v315 = vpop.f32.mrb[0].mxu0
    %v316 = vadd.f32 %v206, %v315
    %317 = vdwg.mxu0
    %v318 = vld [vmem:[%s0 + $0x2] sm:$0xff]
    %v319 = vld [vmem:[%s0 + $0xa] sm:$0xff]
    %v320 = vld [vmem:[%s0 + $0x12] sm:$0xff]
    %v321 = vld [vmem:[%s0 + $0x1a] sm:$0xff]
    %v322 = vld [vmem:[%s0 + $0x22] sm:$0xf]
    %s323 = scalar_lea.vmem [#allocation2], 256
    %v324 = vld [vmem:[%s323] sm:$0xff]
    %v325 = vld [vmem:[%s323 + $0x8] sm:$0xff]
    %v326 = vld [vmem:[%s323 + $0x10] sm:$0xff]
    %v327 = vld [vmem:[%s323 + $0x18] sm:$0xff]
    %v328 = vld [vmem:[%s323 + $0x20] sm:$0xff]
    %v329 = vld [vmem:[%s323 + $0x28] sm:$0xff]
    %v330 = vld [vmem:[%s323 + $0x30] sm:$0xff]
    %v331 = vld [vmem:[%s323 + $0x38] sm:$0xff]
    %v332 = vld [vmem:[%s323 + $0x40] sm:$0xff]
    %v333 = vld [vmem:[%s323 + $0x48] sm:$0xff]
    %v334 = vld [vmem:[%s323 + $0x50] sm:$0xff]
    %v335 = vld [vmem:[%s323 + $0x58] sm:$0xff]
    %v336 = vld [vmem:[%s323 + $0x60] sm:$0xff]
    %v337 = vld [vmem:[%s323 + $0x68] sm:$0xff]
    %v338 = vld [vmem:[%s323 + $0x70] sm:$0xff]
    %v339 = vld [vmem:[%s323 + $0x78] sm:$0xff]
    %v341 = vsel %vm97, %v318, 0
    %v344 = vsel %vm97, %v319, 0
    %v347 = vsel %vm97, %v320, 0
    %v350 = vsel %vm97, %v321, 0
    %v353 = vsel %vm97, %v322, 0
    %355 = vmatprep.subr.mxu0 %v325
    %356 = vmatpush1.msra.mxu0 %v324
    %357 = vmatprep.subr.mxu0 %v327
    %358 = vmatpush1.msra.mxu0 %v326
    %359 = vmatprep.subr.mxu0 %v329
    %360 = vmatpush1.msra.mxu0 %v328
    %361 = vmatprep.subr.mxu0 %v331
    %362 = vmatpush1.msra.mxu0 %v330
    %363 = vmatprep.subr.mxu0 %v333
    %364 = vmatpush1.msra.mxu0 %v332
    %365 = vmatprep.subr.mxu0 %v335
    %366 = vmatpush1.msra.mxu0 %v334
    %367 = vmatprep.subr.mxu0 %v337
    %368 = vmatpush1.msra.mxu0 %v336
    %369 = vmatprep.subr.mxu0 %v339
    %370 = vmatpush1.msra.mxu0 %v338
    %371 = vmatprep.subr.mxu0 0.0
    %372 = vmatpush1.msra.mxu0 0.0
    %373 = vmatprep.subr.mxu0 0.0
    %374 = vmatpush1.msra.mxu0 0.0
    %375 = vmatprep.subr.mxu0 0.0
    %376 = vmatpush1.msra.mxu0 0.0
    %377 = vmatprep.subr.mxu0 0.0
    %378 = vmatpush1.msra.mxu0 0.0
    %379 = vmatprep.subr.mxu0 0.0
    %380 = vmatpush1.msra.mxu0 0.0
    %381 = vmatprep.subr.mxu0 0.0
    %382 = vmatpush1.msra.mxu0 0.0
    %383 = vmatprep.subr.mxu0 0.0
    %384 = vmatpush1.msra.mxu0 0.0
    %385 = vmatprep.subr.mxu0 0.0
    %386 = vmatpush1.msra.mxu0 0.0
    %387 = vmatprep.subr.mxu0 0.0
    %388 = vmatpush1.msra.mxu0 0.0
    %389 = vmatprep.subr.mxu0 0.0
    %390 = vmatpush1.msra.mxu0 0.0
    %391 = vmatprep.subr.mxu0 0.0
    %392 = vmatpush1.msra.mxu0 0.0
    %393 = vmatprep.subr.mxu0 0.0
    %394 = vmatpush1.msra.mxu0 0.0
    %395 = vmatprep.subr.mxu0 0.0
    %396 = vmatpush1.msra.mxu0 0.0
    %397 = vmatprep.subr.mxu0 0.0
    %398 = vmatpush1.msra.mxu0 0.0
    %399 = vmatprep.subr.mxu0 0.0
    %400 = vmatpush1.msra.mxu0 0.0
    %401 = vmatprep.subr.mxu0 0.0
    %402 = vmatpush1.msra.mxu0 0.0
    %403 = vmatprep.subr.mxu0 0.0
    %404 = vmatpush1.msra.mxu0 0.0
    %405 = vmatprep.subr.mxu0 0.0
    %406 = vmatpush1.msra.mxu0 0.0
    %407 = vmatprep.subr.mxu0 0.0
    %408 = vmatpush1.msra.mxu0 0.0
    %409 = vmatprep.subr.mxu0 0.0
    %410 = vmatpush1.msra.mxu0 0.0
    %411 = vmatprep.subr.mxu0 0.0
    %412 = vmatpush1.msra.mxu0 0.0
    %413 = vmatprep.subr.mxu0 0.0
    %414 = vmatpush1.msra.mxu0 0.0
    %415 = vmatprep.subr.mxu0 0.0
    %416 = vmatpush1.msra.mxu0 0.0
    %417 = vmatprep.subr.mxu0 0.0
    %418 = vmatpush1.msra.mxu0 0.0
    %419 = vmatprep.mubr.f32.mxu0 0.0
    %420 = vmatmul.mubr.f32.gmra.mrb[0].mxu0 %v341
    %v421 = vpop.f32.mrb[0].mxu0
    %v422 = vadd.f32 0.0, %v421
    %v423 = vpop.f32.mrb[0].mxu0
    %v424 = vadd.f32 0.0, %v423
    %425 = vmatprep.mubr.f32.mxu0 0.0
    %426 = vmatmul.mubr.f32.gmra.mrb[0].mxu0 %v344
    %v427 = vpop.f32.mrb[0].mxu0
    %v428 = vadd.f32 0.0, %v427
    %v429 = vpop.f32.mrb[0].mxu0
    %v430 = vadd.f32 0.0, %v429
    %431 = vmatprep.mubr.f32.mxu0 0.0
    %432 = vmatmul.mubr.f32.gmra.mrb[0].mxu0 %v347
    %v433 = vpop.f32.mrb[0].mxu0
    %v434 = vadd.f32 0.0, %v433
    %v435 = vpop.f32.mrb[0].mxu0
    %v436 = vadd.f32 0.0, %v435
    %437 = vmatprep.mubr.f32.mxu0 0.0
    %438 = vmatmul.mubr.f32.gmra.mrb[0].mxu0 %v350
    %v439 = vpop.f32.mrb[0].mxu0
    %v440 = vadd.f32 0.0, %v439
    %v441 = vpop.f32.mrb[0].mxu0
    %v442 = vadd.f32 0.0, %v441
    %443 = vmatprep.mubr.f32.mxu0 0.0
    %444 = vmatmul.mubr.f32.gmra.mrb[0].mxu0 %v353
    %v445 = vpop.f32.mrb[0].mxu0
    %v446 = vadd.f32 0.0, %v445
    %v447 = vpop.f32.mrb[0].mxu0
    %v448 = vadd.f32 0.0, %v447
    %449 = vdwg.mxu0
    %v450 = vadd.f32 %v290, %v422
    %v451 = vadd.f32 %v292, %v424
    %v452 = vadd.f32 %v296, %v428
    %v453 = vadd.f32 %v298, %v430
    %v454 = vadd.f32 %v302, %v434
    %v455 = vadd.f32 %v304, %v436
    %v456 = vadd.f32 %v308, %v440
    %v457 = vadd.f32 %v310, %v442
    %v458 = vadd.f32 %v314, %v446
    %v459 = vadd.f32 %v316, %v448
    %v460 = vld [vmem:[%s5] sm:$0x1]
    %v462 = vlaneseq
    %v463 = vshrl.u32 %v462, 7
    %v464 = vsub.s32 0, %v463
    %v465 = vrot.slane %v460, %v464
    %v467 = vadd.f32 %v450, %v465
    %v468 = vadd.f32 %v452, %v465
    %v469 = vadd.f32 %v454, %v465
    %v470 = vadd.f32 %v456, %v465
    %v471 = vadd.f32 %v458, %v465
    %v472 = vld [vmem:[%s2] sm:$0x1]
    %v474 = vlaneseq
    %v475 = vshrl.u32 %v474, 7
    %v476 = vsub.s32 0, %v475
    %v477 = vrot.slane %v472, %v476
    %v479 = vadd.f32 %v451, %v477
    %v480 = vadd.f32 %v453, %v477
    %v481 = vadd.f32 %v455, %v477
    %v482 = vadd.f32 %v457, %v477
    %v483 = vadd.f32 %v459, %v477
    %v484 = vld [vmem:[%s6] sm:$0xff]
    %v485 = vld [vmem:[%s6 + $0x8] sm:$0xff]
    %v486 = vld [vmem:[%s6 + $0x10] sm:$0xff]
    %v487 = vld [vmem:[%s6 + $0x18] sm:$0xff]
    %v488 = vld [vmem:[%s6 + $0x20] sm:$0xf]
    %v489 = vmul.f32 %v479, 0.01
    %v490 = vmul.f32 %v480, 0.01
    %v491 = vmul.f32 %v481, 0.01
    %v492 = vmul.f32 %v482, 0.01
    %v493 = vmul.f32 %v483, 0.01
    %v494 = vmax.f32 %v479, %v489
    %v495 = vmax.f32 %v480, %v490
    %v496 = vmax.f32 %v481, %v491
    %v497 = vmax.f32 %v482, %v492
    %v498 = vmax.f32 %v483, %v493
    %500 = vset.pattern.permute.xlu0 0
    %501 = vperm.xlu0 %500, %v484
    %v502 = vpop.permute.xlu0 %501
    %505 = vset.pattern.permute.xlu0 0
    %506 = vperm.xlu0 %505, %v485
    %v507 = vpop.permute.xlu0 %506
    %510 = vset.pattern.permute.xlu0 0
    %511 = vperm.xlu0 %510, %v486
    %v512 = vpop.permute.xlu0 %511
    %515 = vset.pattern.permute.xlu0 0
    %516 = vperm.xlu0 %515, %v487
    %v517 = vpop.permute.xlu0 %516
    %520 = vset.pattern.permute.xlu0 0
    %521 = vperm.xlu0 %520, %v488
    %v522 = vpop.permute.xlu0 %521
    %v524 = vmul.f32 %v502, %v494
    %v525 = vmul.f32 %v507, %v495
    %v526 = vmul.f32 %v512, %v496
    %v527 = vmul.f32 %v517, %v497
    %v528 = vmul.f32 %v522, %v498
    %v529 = vld [vmem:[#allocation4] sm:$0xff]
    %v530 = vld [vmem:[#allocation4 + $0x8] sm:$0xff]
    %v531 = vld [vmem:[#allocation4 + $0x10] sm:$0xff]
    %v532 = vld [vmem:[#allocation4 + $0x18] sm:$0xff]
    %v533 = vld [vmem:[#allocation4 + $0x20] sm:$0xff]
    %v534 = vld [vmem:[#allocation4 + $0x28] sm:$0xff]
    %v535 = vld [vmem:[#allocation4 + $0x30] sm:$0xff]
    %v536 = vld [vmem:[#allocation4 + $0x38] sm:$0xff]
    %s537 = scalar_lea.vmem [#allocation4], 64
    %v538 = vld [vmem:[%s537] sm:$0xff]
    %v539 = vld [vmem:[%s537 + $0x8] sm:$0xff]
    %v540 = vld [vmem:[%s537 + $0x10] sm:$0xff]
    %v541 = vld [vmem:[%s537 + $0x18] sm:$0xff]
    %v542 = vld [vmem:[%s537 + $0x20] sm:$0xff]
    %v543 = vld [vmem:[%s537 + $0x28] sm:$0xff]
    %v544 = vld [vmem:[%s537 + $0x30] sm:$0xff]
    %v545 = vld [vmem:[%s537 + $0x38] sm:$0xff]
    %vm551 = vcmask 1046528
    %v552 = vrot.slane %v524, 1
    %v553 = vrot.slane %v525, 1
    %v554 = vsel %vm551, %v552, %v553
    %v555 = vrot.slane %v526, 1
    %v556 = vsel %vm551, %v553, %v555
    %v557 = vrot.slane %v527, 1
    %v558 = vsel %vm551, %v555, %v557
    %v559 = vrot.slane %v528, 1
    %v560 = vsel %vm551, %v557, %v559
    %v561 = vsel %vm97, %v554, 0
    %v563 = vsel %vm97, %v556, 0
    %v565 = vsel %vm97, %v558, 0
    %v567 = vsel %vm97, %v560, 0
    %v569 = vsel %vm97, %v559, 0
    %571 = vmatprep.subr.mxu0 0.0
    %572 = vmatpush1.msra.mxu0 %v538
    %573 = vmatprep.subr.mxu0 0.0
    %574 = vmatpush1.msra.mxu0 %v539
    %575 = vmatprep.subr.mxu0 0.0
    %576 = vmatpush1.msra.mxu0 %v540
    %577 = vmatprep.subr.mxu0 0.0
    %578 = vmatpush1.msra.mxu0 %v541
    %579 = vmatprep.subr.mxu0 0.0
    %580 = vmatpush1.msra.mxu0 %v542
    %581 = vmatprep.subr.mxu0 0.0
    %582 = vmatpush1.msra.mxu0 %v543
    %583 = vmatprep.subr.mxu0 0.0
    %584 = vmatpush1.msra.mxu0 %v544
    %585 = vmatprep.subr.mxu0 0.0
    %586 = vmatpush1.msra.mxu0 %v545
    %587 = vmatprep.subr.mxu0 0.0
    %588 = vmatpush1.msra.mxu0 0.0
    %589 = vmatprep.subr.mxu0 0.0
    %590 = vmatpush1.msra.mxu0 0.0
    %591 = vmatprep.subr.mxu0 0.0
    %592 = vmatpush1.msra.mxu0 0.0
    %593 = vmatprep.subr.mxu0 0.0
    %594 = vmatpush1.msra.mxu0 0.0
    %595 = vmatprep.subr.mxu0 0.0
    %596 = vmatpush1.msra.mxu0 0.0
    %597 = vmatprep.subr.mxu0 0.0
    %598 = vmatpush1.msra.mxu0 0.0
    %599 = vmatprep.subr.mxu0 0.0
    %600 = vmatpush1.msra.mxu0 0.0
    %601 = vmatprep.subr.mxu0 0.0
    %602 = vmatpush1.msra.mxu0 0.0
    %603 = vmatprep.subr.mxu0 0.0
    %604 = vmatpush1.msra.mxu0 0.0
    %605 = vmatprep.subr.mxu0 0.0
    %606 = vmatpush1.msra.mxu0 0.0
    %607 = vmatprep.subr.mxu0 0.0
    %608 = vmatpush1.msra.mxu0 0.0
    %609 = vmatprep.subr.mxu0 0.0
    %610 = vmatpush1.msra.mxu0 0.0
    %611 = vmatprep.subr.mxu0 0.0
    %612 = vmatpush1.msra.mxu0 0.0
    %613 = vmatprep.subr.mxu0 0.0
    %614 = vmatpush1.msra.mxu0 0.0
    %615 = vmatprep.subr.mxu0 0.0
    %616 = vmatpush1.msra.mxu0 0.0
    %617 = vmatprep.subr.mxu0 0.0
    %618 = vmatpush1.msra.mxu0 0.0
    %619 = vmatprep.subr.mxu0 0.0
    %620 = vmatpush1.msra.mxu0 0.0
    %621 = vmatprep.subr.mxu0 0.0
    %622 = vmatpush1.msra.mxu0 0.0
    %623 = vmatprep.subr.mxu0 0.0
    %624 = vmatpush1.msra.mxu0 0.0
    %625 = vmatprep.subr.mxu0 0.0
    %626 = vmatpush1.msra.mxu0 0.0
    %627 = vmatprep.subr.mxu0 0.0
    %628 = vmatpush1.msra.mxu0 0.0
    %629 = vmatprep.subr.mxu0 0.0
    %630 = vmatpush1.msra.mxu0 0.0
    %631 = vmatprep.subr.mxu0 0.0
    %632 = vmatpush1.msra.mxu0 0.0
    %633 = vmatprep.subr.mxu0 0.0
    %634 = vmatpush1.msra.mxu0 0.0
    %635 = vmatprep.mubr.f32.mxu0 0.0
    %636 = vmatmul.mubr.f32.gmra.mrb[0].mxu0 %v561
    %v637 = vpop.f32.mrb[0].mxu0
    %v638 = vadd.f32 0.0, %v637
    %v639 = vpop.f32.mrb[0].mxu0
    %640 = vmatprep.mubr.f32.mxu0 0.0
    %641 = vmatmul.mubr.f32.gmra.mrb[0].mxu0 %v563
    %v642 = vpop.f32.mrb[0].mxu0
    %v643 = vadd.f32 0.0, %v642
    %v644 = vpop.f32.mrb[0].mxu0
    %645 = vmatprep.mubr.f32.mxu0 0.0
    %646 = vmatmul.mubr.f32.gmra.mrb[0].mxu0 %v565
    %v647 = vpop.f32.mrb[0].mxu0
    %v648 = vadd.f32 0.0, %v647
    %v649 = vpop.f32.mrb[0].mxu0
    %650 = vmatprep.mubr.f32.mxu0 0.0
    %651 = vmatmul.mubr.f32.gmra.mrb[0].mxu0 %v567
    %v652 = vpop.f32.mrb[0].mxu0
    %v653 = vadd.f32 0.0, %v652
    %v654 = vpop.f32.mrb[0].mxu0
    %655 = vmatprep.mubr.f32.mxu0 0.0
    %656 = vmatmul.mubr.f32.gmra.mrb[0].mxu0 %v569
    %v657 = vpop.f32.mrb[0].mxu0
    %v658 = vadd.f32 0.0, %v657
    %v659 = vpop.f32.mrb[0].mxu0
    %660 = vdwg.mxu0
    %v661 = vsel %vm97, %v524, 0
    %v663 = vsel %vm97, %v525, 0
    %v665 = vsel %vm97, %v526, 0
    %v667 = vsel %vm97, %v527, 0
    %v669 = vsel %vm97, %v528, 0
    %671 = vmatprep.subr.mxu0 0.0
    %672 = vmatpush1.msra.mxu0 %v529
    %673 = vmatprep.subr.mxu0 0.0
    %674 = vmatpush1.msra.mxu0 %v530
    %675 = vmatprep.subr.mxu0 0.0
    %676 = vmatpush1.msra.mxu0 %v531
    %677 = vmatprep.subr.mxu0 0.0
    %678 = vmatpush1.msra.mxu0 %v532
    %679 = vmatprep.subr.mxu0 0.0
    %680 = vmatpush1.msra.mxu0 %v533
    %681 = vmatprep.subr.mxu0 0.0
    %682 = vmatpush1.msra.mxu0 %v534
    %683 = vmatprep.subr.mxu0 0.0
    %684 = vmatpush1.msra.mxu0 %v535
    %685 = vmatprep.subr.mxu0 0.0
    %686 = vmatpush1.msra.mxu0 %v536
    %687 = vmatprep.subr.mxu0 0.0
    %688 = vmatpush1.msra.mxu0 0.0
    %689 = vmatprep.subr.mxu0 0.0
    %690 = vmatpush1.msra.mxu0 0.0
    %691 = vmatprep.subr.mxu0 0.0
    %692 = vmatpush1.msra.mxu0 0.0
    %693 = vmatprep.subr.mxu0 0.0
    %694 = vmatpush1.msra.mxu0 0.0
    %695 = vmatprep.subr.mxu0 0.0
    %696 = vmatpush1.msra.mxu0 0.0
    %697 = vmatprep.subr.mxu0 0.0
    %698 = vmatpush1.msra.mxu0 0.0
    %699 = vmatprep.subr.mxu0 0.0
    %700 = vmatpush1.msra.mxu0 0.0
    %701 = vmatprep.subr.mxu0 0.0
    %702 = vmatpush1.msra.mxu0 0.0
    %703 = vmatprep.subr.mxu0 0.0
    %704 = vmatpush1.msra.mxu0 0.0
    %705 = vmatprep.subr.mxu0 0.0
    %706 = vmatpush1.msra.mxu0 0.0
    %707 = vmatprep.subr.mxu0 0.0
    %708 = vmatpush1.msra.mxu0 0.0
    %709 = vmatprep.subr.mxu0 0.0
    %710 = vmatpush1.msra.mxu0 0.0
    %711 = vmatprep.subr.mxu0 0.0
    %712 = vmatpush1.msra.mxu0 0.0
    %713 = vmatprep.subr.mxu0 0.0
    %714 = vmatpush1.msra.mxu0 0.0
    %715 = vmatprep.subr.mxu0 0.0
    %716 = vmatpush1.msra.mxu0 0.0
    %717 = vmatprep.subr.mxu0 0.0
    %718 = vmatpush1.msra.mxu0 0.0
    %719 = vmatprep.subr.mxu0 0.0
    %720 = vmatpush1.msra.mxu0 0.0
    %721 = vmatprep.subr.mxu0 0.0
    %722 = vmatpush1.msra.mxu0 0.0
    %723 = vmatprep.subr.mxu0 0.0
    %724 = vmatpush1.msra.mxu0 0.0
    %725 = vmatprep.subr.mxu0 0.0
    %726 = vmatpush1.msra.mxu0 0.0
    %727 = vmatprep.subr.mxu0 0.0
    %728 = vmatpush1.msra.mxu0 0.0
    %729 = vmatprep.subr.mxu0 0.0
    %730 = vmatpush1.msra.mxu0 0.0
    %731 = vmatprep.subr.mxu0 0.0
    %732 = vmatpush1.msra.mxu0 0.0
    %733 = vmatprep.subr.mxu0 0.0
    %734 = vmatpush1.msra.mxu0 0.0
    %735 = vmatprep.mubr.f32.mxu0 0.0
    %736 = vmatmul.mubr.f32.gmra.mrb[0].mxu0 %v661
    %v737 = vpop.f32.mrb[0].mxu0
    %v738 = vadd.f32 %v638, %v737
    %v739 = vpop.f32.mrb[0].mxu0
    %740 = vmatprep.mubr.f32.mxu0 0.0
    %741 = vmatmul.mubr.f32.gmra.mrb[0].mxu0 %v663
    %v742 = vpop.f32.mrb[0].mxu0
    %v743 = vadd.f32 %v643, %v742
    %v744 = vpop.f32.mrb[0].mxu0
    %745 = vmatprep.mubr.f32.mxu0 0.0
    %746 = vmatmul.mubr.f32.gmra.mrb[0].mxu0 %v665
    %v747 = vpop.f32.mrb[0].mxu0
    %v748 = vadd.f32 %v648, %v747
    %v749 = vpop.f32.mrb[0].mxu0
    %750 = vmatprep.mubr.f32.mxu0 0.0
    %751 = vmatmul.mubr.f32.gmra.mrb[0].mxu0 %v667
    %v752 = vpop.f32.mrb[0].mxu0
    %v753 = vadd.f32 %v653, %v752
    %v754 = vpop.f32.mrb[0].mxu0
    %755 = vmatprep.mubr.f32.mxu0 0.0
    %756 = vmatmul.mubr.f32.gmra.mrb[0].mxu0 %v669
    %v757 = vpop.f32.mrb[0].mxu0
    %v758 = vadd.f32 %v658, %v757
    %v759 = vpop.f32.mrb[0].mxu0
    %760 = vdwg.mxu0
    %s761 = scalar_lea.vmem [#allocation4], 128
    %v762 = vld [vmem:[%s761] sm:$0xff]
    %v763 = vld [vmem:[%s761 + $0x8] sm:$0xff]
    %v764 = vld [vmem:[%s761 + $0x10] sm:$0xff]
    %v765 = vld [vmem:[%s761 + $0x18] sm:$0xff]
    %v766 = vld [vmem:[%s761 + $0x20] sm:$0xff]
    %v767 = vld [vmem:[%s761 + $0x28] sm:$0xff]
    %v768 = vld [vmem:[%s761 + $0x30] sm:$0xff]
    %v769 = vld [vmem:[%s761 + $0x38] sm:$0xff]
    %vm770 = vcmask 1045504
    %v771 = vrot.slane %v524, 2
    %v772 = vrot.slane %v525, 2
    %v773 = vsel %vm770, %v771, %v772
    %v774 = vrot.slane %v526, 2
    %v775 = vsel %vm770, %v772, %v774
    %v776 = vrot.slane %v527, 2
    %v777 = vsel %vm770, %v774, %v776
    %v778 = vrot.slane %v528, 2
    %v779 = vsel %vm770, %v776, %v778
    %v780 = vsel %vm97, %v773, 0
    %v782 = vsel %vm97, %v775, 0
    %v784 = vsel %vm97, %v777, 0
    %v786 = vsel %vm97, %v779, 0
    %v788 = vsel %vm97, %v778, 0
    %790 = vmatprep.subr.mxu0 0.0
    %791 = vmatpush1.msra.mxu0 %v762
    %792 = vmatprep.subr.mxu0 0.0
    %793 = vmatpush1.msra.mxu0 %v763
    %794 = vmatprep.subr.mxu0 0.0
    %795 = vmatpush1.msra.mxu0 %v764
    %796 = vmatprep.subr.mxu0 0.0
    %797 = vmatpush1.msra.mxu0 %v765
    %798 = vmatprep.subr.mxu0 0.0
    %799 = vmatpush1.msra.mxu0 %v766
    %800 = vmatprep.subr.mxu0 0.0
    %801 = vmatpush1.msra.mxu0 %v767
    %802 = vmatprep.subr.mxu0 0.0
    %803 = vmatpush1.msra.mxu0 %v768
    %804 = vmatprep.subr.mxu0 0.0
    %805 = vmatpush1.msra.mxu0 %v769
    %806 = vmatprep.subr.mxu0 0.0
    %807 = vmatpush1.msra.mxu0 0.0
    %808 = vmatprep.subr.mxu0 0.0
    %809 = vmatpush1.msra.mxu0 0.0
    %810 = vmatprep.subr.mxu0 0.0
    %811 = vmatpush1.msra.mxu0 0.0
    %812 = vmatprep.subr.mxu0 0.0
    %813 = vmatpush1.msra.mxu0 0.0
    %814 = vmatprep.subr.mxu0 0.0
    %815 = vmatpush1.msra.mxu0 0.0
    %816 = vmatprep.subr.mxu0 0.0
    %817 = vmatpush1.msra.mxu0 0.0
    %818 = vmatprep.subr.mxu0 0.0
    %819 = vmatpush1.msra.mxu0 0.0
    %820 = vmatprep.subr.mxu0 0.0
    %821 = vmatpush1.msra.mxu0 0.0
    %822 = vmatprep.subr.mxu0 0.0
    %823 = vmatpush1.msra.mxu0 0.0
    %824 = vmatprep.subr.mxu0 0.0
    %825 = vmatpush1.msra.mxu0 0.0
    %826 = vmatprep.subr.mxu0 0.0
    %827 = vmatpush1.msra.mxu0 0.0
    %828 = vmatprep.subr.mxu0 0.0
    %829 = vmatpush1.msra.mxu0 0.0
    %830 = vmatprep.subr.mxu0 0.0
    %831 = vmatpush1.msra.mxu0 0.0
    %832 = vmatprep.subr.mxu0 0.0
    %833 = vmatpush1.msra.mxu0 0.0
    %834 = vmatprep.subr.mxu0 0.0
    %835 = vmatpush1.msra.mxu0 0.0
    %836 = vmatprep.subr.mxu0 0.0
    %837 = vmatpush1.msra.mxu0 0.0
    %838 = vmatprep.subr.mxu0 0.0
    %839 = vmatpush1.msra.mxu0 0.0
    %840 = vmatprep.subr.mxu0 0.0
    %841 = vmatpush1.msra.mxu0 0.0
    %842 = vmatprep.subr.mxu0 0.0
    %843 = vmatpush1.msra.mxu0 0.0
    %844 = vmatprep.subr.mxu0 0.0
    %845 = vmatpush1.msra.mxu0 0.0
    %846 = vmatprep.subr.mxu0 0.0
    %847 = vmatpush1.msra.mxu0 0.0
    %848 = vmatprep.subr.mxu0 0.0
    %849 = vmatpush1.msra.mxu0 0.0
    %850 = vmatprep.subr.mxu0 0.0
    %851 = vmatpush1.msra.mxu0 0.0
    %852 = vmatprep.subr.mxu0 0.0
    %853 = vmatpush1.msra.mxu0 0.0
    %854 = vmatprep.mubr.f32.mxu0 0.0
    %855 = vmatmul.mubr.f32.gmra.mrb[0].mxu0 %v780
    %v856 = vpop.f32.mrb[0].mxu0
    %v857 = vadd.f32 0.0, %v856
    %v858 = vpop.f32.mrb[0].mxu0
    %859 = vmatprep.mubr.f32.mxu0 0.0
    %860 = vmatmul.mubr.f32.gmra.mrb[0].mxu0 %v782
    %v861 = vpop.f32.mrb[0].mxu0
    %v862 = vadd.f32 0.0, %v861
    %v863 = vpop.f32.mrb[0].mxu0
    %864 = vmatprep.mubr.f32.mxu0 0.0
    %865 = vmatmul.mubr.f32.gmra.mrb[0].mxu0 %v784
    %v866 = vpop.f32.mrb[0].mxu0
    %v867 = vadd.f32 0.0, %v866
    %v868 = vpop.f32.mrb[0].mxu0
    %869 = vmatprep.mubr.f32.mxu0 0.0
    %870 = vmatmul.mubr.f32.gmra.mrb[0].mxu0 %v786
    %v871 = vpop.f32.mrb[0].mxu0
    %v872 = vadd.f32 0.0, %v871
    %v873 = vpop.f32.mrb[0].mxu0
    %874 = vmatprep.mubr.f32.mxu0 0.0
    %875 = vmatmul.mubr.f32.gmra.mrb[0].mxu0 %v788
    %v876 = vpop.f32.mrb[0].mxu0
    %v877 = vadd.f32 0.0, %v876
    %v878 = vpop.f32.mrb[0].mxu0
    %879 = vdwg.mxu0
    %v880 = vadd.f32 %v738, %v857
    %v881 = vadd.f32 %v743, %v862
    %v882 = vadd.f32 %v748, %v867
    %v883 = vadd.f32 %v753, %v872
    %v884 = vadd.f32 %v758, %v877
    %v885 = vld [vmem:[%s4] sm:$0x1]
    %v887 = vlaneseq
    %v888 = vshrl.u32 %v887, 7
    %v889 = vsub.s32 0, %v888
    %v890 = vrot.slane %v885, %v889
    %v892 = vadd.f32 %v880, %v890
    %v893 = vadd.f32 %v881, %v890
    %v894 = vadd.f32 %v882, %v890
    %v895 = vadd.f32 %v883, %v890
    %v896 = vadd.f32 %v884, %v890
    %v897 = vmul.f32 %v892, 0.01
    %v898 = vmul.f32 %v893, 0.01
    %v899 = vmul.f32 %v894, 0.01
    %v900 = vmul.f32 %v895, 0.01
    %v901 = vmul.f32 %v896, 0.01
    %v902 = vmax.f32 %v892, %v897
    %v903 = vmax.f32 %v893, %v898
    %v904 = vmax.f32 %v894, %v899
    %v905 = vmax.f32 %v895, %v900
    %v906 = vmax.f32 %v896, %v901
    %v907 = vadd.f32 %v902, %v467
    %v908 = vadd.f32 %v903, %v468
    %v909 = vadd.f32 %v904, %v469
    %v910 = vadd.f32 %v905, %v470
    %v911 = vadd.f32 %v906, %v471
    %912 = vst [vmem:[%s7] sm:$0xff] %v907
    %913 = vst [vmem:[%s7 + $0x8] sm:$0xff] %v908
    %914 = vst [vmem:[%s7 + $0x10] sm:$0xff] %v909
    %915 = vst [vmem:[%s7 + $0x18] sm:$0xff] %v910
    %916 = vst [vmem:[%s7 + $0x20] sm:$0x3] %v911
    // Predicated region
    $region38: #{tpu_custom_call.1} parent=1 // pred_check
      _
    $region39: #{tpu_custom_call.1} parent=1 // pred_check_branch
      %918 = sbr.rel (0) target = $region41
    $region40: #{tpu_custom_call.1} parent=1 // pred_region
      _
    $region41: #{tpu_custom_call.1} parent=1 // pred_fallthru
      _
    // Predicated region
    $region42: #{tpu_custom_call.1} parent=1 // pred_check
      _
    $region43: #{tpu_custom_call.1} parent=1 // pred_check_branch
      %920 = sbr.rel (0) target = $region45
    $region44: #{tpu_custom_call.1} parent=1 // pred_region
      _
    $region45: #{tpu_custom_call.1} parent=1 // pred_fallthru
      _
    %921 = vsyncpa [#allocation3], 1
    %922 = vsyncpa [#allocation5], 1

</llo_original>
